<compile_context>
chip_gen: v5e
topology: v5e:2x2
jax: 0.10.0
libtpu: 0.0.40
codegen_flags: <defaults>
</compile_context>

<pallas_src>
import functools

import jax
import jax.numpy as jnp
from jax import lax
from jax.experimental import pallas as pl
from jax.experimental.pallas import tpu as pltpu


def _hash_u32(x):
    """Cheap integer mix (murmur-style finalizer) -> uniform uint32 bits."""
    x = x ^ (x >> 16)
    x = x * jnp.uint32(0x7FEB352D)
    x = x ^ (x >> 15)
    x = x * jnp.uint32(0x846CA68B)
    x = x ^ (x >> 16)
    return x


def conv_relu_stats_kernel(patches_ref, w_ref, b_ref,
                           y_ref, sum_ref, sq_ref, *, m_real, tm, need_mask):
    """Per column-tile: y = relu(W @ patches + b); accumulate channel sum / sumsq."""
    i = pl.program_id(0)

    @pl.when(i == 0)
    def _init():
        sum_ref[...] = jnp.zeros_like(sum_ref)
        sq_ref[...] = jnp.zeros_like(sq_ref)

    # Conv as matmul: bf16 operands, f32 accumulation on the MXU.  (Cout, TM)
    y = jnp.dot(w_ref[...], patches_ref[...], preferred_element_type=jnp.float32)
    y = jnp.maximum(y + b_ref[...], 0.0)          # bias + ReLU
    y_ref[...] = y

    # Single-pass stats (sum, sum of squares); mask pad columns out of the reduction.
    if need_mask:
        col = i * tm + lax.broadcasted_iota(jnp.int32, y.shape, 1)
        y = jnp.where(col < m_real, y, 0.0)
    sum_ref[...] += jnp.sum(y, axis=1, keepdims=True)
    sq_ref[...] += jnp.sum(y * y, axis=1, keepdims=True)


def bn_dropout_kernel(seed_ref, y_ref, sum_ref, sq_ref, g_ref, b_ref, o_ref,
                      *, m_real, m_pad, tm, drop_p, bn_eps):
    """Per column-tile: BatchNorm (train-mode, global stats) + dropout."""
    i = pl.program_id(0)
    y = y_ref[...]                                            # (Cout, TM) f32

    inv_m = 1.0 / float(m_real)
    mean = sum_ref[...] * inv_m                               # (Cout, 1)
    var = jnp.maximum(sq_ref[...] * inv_m - mean * mean, 0.0)  # biased variance
    # gamma/(1-p), beta/(1-p) were folded in the wrapper -> dropout scale is free here.
    scale = g_ref[...] * lax.rsqrt(var + bn_eps)
    shift = b_ref[...] - mean * scale
    out = y * scale + shift

    if drop_p > 0.0:
        # TODO(synk): dropout semantics match nn.Dropout(train) but not PyTorch's RNG stream.
        chan = lax.broadcasted_iota(jnp.int32, y.shape, 0)
        col = i * tm + lax.broadcasted_iota(jnp.int32, y.shape, 1)
        idx = (chan * m_pad + col).astype(jnp.uint32)          # unique per element/tile
        seed_u = seed_ref[0].astype(jnp.uint32)
        bits = _hash_u32(idx + seed_u * jnp.uint32(0x9E3779B9))
        thr = jnp.uint32(min(int(drop_p * 4294967296.0), 4294967295))
        out = jnp.where(bits >= thr, out, 0.0)

    o_ref[...] = out.astype(o_ref.dtype)


def conv_block_forward(x_nchw, conv_w, conv_b, gamma, beta, seed,
                       *, stride=2, drop_p=0.1, bn_eps=1e-5):
    """x_nchw: (N, Cin, H, W).  conv_w: (Cout, Cin, 3, 3).  Returns (N, Cout, OH, OW)."""
    N, Cin, H, W = x_nchw.shape
    Cout = conv_w.shape[0]
    KH = KW = 3
    OH = (H + 2 - KH) // stride + 1
    OW = (W + 2 - KW) // stride + 1
    M = N * OH * OW
    K = KH * KW * Cin

    # Lane tile over the flattened (N*OH*OW) axis.
    TM = 512
    if M < TM:
        TM = ((M + 127) // 128) * 128
    Mp = ((M + TM - 1) // TM) * TM
    n_tiles = Mp // TM

    # ---- glue: NCHW -> padded NHWC -> transposed im2col (K, M), bf16 into the MXU ----
    # TODO(synk): im2col still materializes K=9*Cin rows in HBM; a direct-conv
    #             tap-accumulation kernel would cut input DMA another ~9x.
    x = jnp.transpose(x_nchw, (0, 2, 3, 1))                        # (N, H, W, Cin)
    xp = jnp.pad(x, ((0, 0), (1, 1), (1, 1), (0, 0)))              # (N, H+2, W+2, Cin)
    taps = []
    for di in range(KH):
        for dj in range(KW):
            t = xp[:, di:di + stride * OH:stride,
                   dj:dj + stride * OW:stride, :]                  # (N, OH, OW, Cin)
            taps.append(jnp.transpose(t, (3, 0, 1, 2)).reshape(Cin, M))
    patches_t = jnp.concatenate(taps, axis=0)                      # (K, M), rows = (tap, cin)
    patches_t = jnp.pad(patches_t, ((0, 0), (0, Mp - M))).astype(jnp.bfloat16)

    # weights: (Cout, Cin, KH, KW) -> (Cout, K) with K ordered (kh, kw, cin) to match patches.
    w_t = jnp.transpose(conv_w, (0, 2, 3, 1)).reshape(Cout, K).astype(jnp.bfloat16)
    b_col = conv_b.reshape(Cout, 1).astype(jnp.float32)

    inv_keep = 1.0 / (1.0 - drop_p) if drop_p > 0.0 else 1.0       # fold dropout scale
    g_col = (gamma * inv_keep).reshape(Cout, 1).astype(jnp.float32)
    be_col = (beta * inv_keep).reshape(Cout, 1).astype(jnp.float32)
    seed_arr = jnp.array([seed], dtype=jnp.int32)

    cparams_seq = pltpu.CompilerParams(dimension_semantics=("arbitrary",),
                                       vmem_limit_bytes=32 * 1024 * 1024)
    cparams_par = pltpu.CompilerParams(dimension_semantics=("parallel",),
                                       vmem_limit_bytes=32 * 1024 * 1024)

    # ---- kernel 1: conv + bias + ReLU, accumulate channel sum / sumsq ----
    k1 = functools.partial(conv_relu_stats_kernel,
                           m_real=M, tm=TM, need_mask=(Mp != M))
    y2d, ch_sum, ch_sq = pl.pallas_call(
        k1,
        out_shape=(jax.ShapeDtypeStruct((Cout, Mp), jnp.float32),
                   jax.ShapeDtypeStruct((Cout, 1), jnp.float32),
                   jax.ShapeDtypeStruct((Cout, 1), jnp.float32)),
        grid_spec=pltpu.PrefetchScalarGridSpec(
            num_scalar_prefetch=0,
            grid=(n_tiles,),
            in_specs=[
                pl.BlockSpec((K, TM), lambda i: (0, i)),
                pl.BlockSpec((Cout, K), lambda i: (0, 0)),
                pl.BlockSpec((Cout, 1), lambda i: (0, 0)),
            ],
            out_specs=(
                pl.BlockSpec((Cout, TM), lambda i: (0, i)),
                pl.BlockSpec((Cout, 1), lambda i: (0, 0)),   # resident accumulator
                pl.BlockSpec((Cout, 1), lambda i: (0, 0)),   # resident accumulator
            ),
        ),
        compiler_params=cparams_seq,
    )(patches_t, w_t, b_col)

    # ---- kernel 2: BatchNorm(train) + Dropout, per tile ("parallel" -> megacore) ----
    k2 = functools.partial(bn_dropout_kernel,
                           m_real=M, m_pad=Mp, tm=TM, drop_p=drop_p, bn_eps=bn_eps)
    out2d = pl.pallas_call(
        k2,
        out_shape=jax.ShapeDtypeStruct((Cout, Mp), jnp.float32),
        grid_spec=pltpu.PrefetchScalarGridSpec(
            num_scalar_prefetch=1,                  # seed lands in SMEM
            grid=(n_tiles,),
            in_specs=[
                pl.BlockSpec((Cout, TM), lambda i, seed: (0, i)),
                pl.BlockSpec((Cout, 1), lambda i, seed: (0, 0)),
                pl.BlockSpec((Cout, 1), lambda i, seed: (0, 0)),
                pl.BlockSpec((Cout, 1), lambda i, seed: (0, 0)),
                pl.BlockSpec((Cout, 1), lambda i, seed: (0, 0)),
            ],
            out_specs=pl.BlockSpec((Cout, TM), lambda i, seed: (0, i)),
        ),
        compiler_params=cparams_par,
    )(seed_arr, y2d, ch_sum, ch_sq, g_col, be_col)

    # (Cout, M) -> (Cout, N, OH, OW) -> NCHW (leading-dim permute only, cheap).
    out = out2d[:, :M].reshape(Cout, N, OH, OW)
    return jnp.transpose(out, (1, 0, 2, 3))


if __name__ == "__main__":
    key = jax.random.PRNGKey(0)
    k_x, k_w, k_b = jax.random.split(key, 3)

    N, Cin, H, W = 2, 4, 16, 16
    Cout = 8

    x = jax.random.normal(k_x, (N, Cin, H, W), dtype=jnp.float32)
    conv_w = jax.random.normal(k_w, (Cout, Cin, 3, 3), dtype=jnp.float32) * 0.1
    conv_b = jax.random.normal(k_b, (Cout,), dtype=jnp.float32) * 0.1
    gamma = jnp.ones((Cout,), dtype=jnp.float32)   # BatchNorm2d default init
    beta = jnp.zeros((Cout,), dtype=jnp.float32)

    out = conv_block_forward(x, conv_w, conv_b, gamma, beta, seed=0)
    out = jax.block_until_ready(out)
    assert out.shape == (N, Cout, H // 2, W // 2), out.shape
    assert bool(jnp.all(jnp.isfinite(out)))

    # Self-check (dropout disabled) against a pure-JAX reference of conv->relu->BN(train).
    out_nd = conv_block_forward(x, conv_w, conv_b, gamma, beta, seed=0, drop_p=0.0)
    ref = lax.conv_general_dilated(x, conv_w, (2, 2), ((1, 1), (1, 1)),
                                   dimension_numbers=("NCHW", "OIHW", "NCHW"))
    ref = jnp.maximum(ref + conv_b[None, :, None, None], 0.0)
    mu = ref.mean(axis=(0, 2, 3), keepdims=True)
    va = ref.var(axis=(0, 2, 3), keepdims=True)
    ref = ((ref - mu) * lax.rsqrt(va + 1e-5) * gamma[None, :, None, None]
           + beta[None, :, None, None])
    assert bool(jnp.allclose(out_nd, ref, atol=0.1, rtol=0.1)), \
        float(jnp.max(jnp.abs(out_nd - ref)))

    print("KERNEL_OK")
</pallas_src>

<mosaic_0001>
module attributes {stable_mosaic.version = 11 : i64} {
  func.func @conv_relu_stats_kernel(%arg0: i32, %arg1: memref<36x128xbf16, #tpu.memory_space<vmem>>, %arg2: memref<8x36xbf16, #tpu.memory_space<vmem>>, %arg3: memref<8x1xf32, #tpu.memory_space<vmem>>, %arg4: memref<8x128xf32, #tpu.memory_space<vmem>>, %arg5: memref<8x1xf32, #tpu.memory_space<vmem>>, %arg6: memref<8x1xf32, #tpu.memory_space<vmem>>) attributes {dimension_semantics = [#tpu.dimension_semantics<arbitrary>], iteration_bounds = array<i64: 1>, scalar_prefetch = 0 : i64, scratch_operands = 0 : i64, tpu.core_type = #tpu.core_type<tc>, window_params = [{transform_indices = @transform_0, window_bounds = array<i64: 36, 128>}, {pipeline_mode = #tpu.pipeline_mode<synchronous>, transform_indices = @transform_1, window_bounds = array<i64: 8, 36>}, {pipeline_mode = #tpu.pipeline_mode<synchronous>, transform_indices = @transform_2, window_bounds = array<i64: 8, 1>}, {transform_indices = @transform_3, window_bounds = array<i64: 8, 128>}, {pipeline_mode = #tpu.pipeline_mode<synchronous>, transform_indices = @transform_4, window_bounds = array<i64: 8, 1>}, {pipeline_mode = #tpu.pipeline_mode<synchronous>, transform_indices = @transform_5, window_bounds = array<i64: 8, 1>}]} {
    %c0_i32 = arith.constant 0 : i32
    %0 = arith.cmpi eq, %arg0, %c0_i32 : i32
    %1 = arith.extui %0 : i1 to i32
    %c0_i32_0 = arith.constant 0 : i32
    %2 = arith.cmpi ne, %1, %c0_i32_0 : i32
    scf.if %2 {
      %cst_19 = arith.constant 0.000000e+00 : f32
      %23 = vector.broadcast %cst_19 : f32 to vector<8x1xf32>
      %c0_20 = arith.constant 0 : index
      %c0_21 = arith.constant 0 : index
      %24 = vector.load %arg5[%c0_20, %c0_21] : memref<8x1xf32, #tpu.memory_space<vmem>>, vector<8x1xf32>
      tpu.vector_store %arg5[%c0_20, %c0_21], %23 {strides = array<i32>} : memref<8x1xf32, #tpu.memory_space<vmem>>, vector<8x1xf32>,
      %cst_22 = arith.constant 0.000000e+00 : f32
      %25 = vector.broadcast %cst_22 : f32 to vector<8x1xf32>
      %c0_23 = arith.constant 0 : index
      %c0_24 = arith.constant 0 : index
      %26 = vector.load %arg6[%c0_23, %c0_24] : memref<8x1xf32, #tpu.memory_space<vmem>>, vector<8x1xf32>
      tpu.vector_store %arg6[%c0_23, %c0_24], %25 {strides = array<i32>} : memref<8x1xf32, #tpu.memory_space<vmem>>, vector<8x1xf32>,
    } else {
    }
    %c0 = arith.constant 0 : index
    %c0_1 = arith.constant 0 : index
    %3 = vector.load %arg2[%c0, %c0_1] : memref<8x36xbf16, #tpu.memory_space<vmem>>, vector<8x36xbf16>
    %c0_2 = arith.constant 0 : index
    %c0_3 = arith.constant 0 : index
    %4 = vector.load %arg1[%c0_2, %c0_3] : memref<36x128xbf16, #tpu.memory_space<vmem>>, vector<36x128xbf16>
    %cst = arith.constant dense<0.000000e+00> : vector<8x128xf32>
    %5 = tpu.matmul %3, %4, %cst {dimension_numbers = #tpu.dot_dimension_numbers<[1], [0], [0], [1], [0, 0, 1, 1], [], []>} : vector<8x36xbf16>, vector<36x128xbf16>, vector<8x128xf32> -> vector<8x128xf32>
    %c0_4 = arith.constant 0 : index
    %c0_5 = arith.constant 0 : index
    %6 = vector.load %arg3[%c0_4, %c0_5] : memref<8x1xf32, #tpu.memory_space<vmem>>, vector<8x1xf32>
    %7 = vector.broadcast %6 : vector<8x1xf32> to vector<8x128xf32>
    %8 = arith.addf %5, %7 : vector<8x128xf32>
    %cst_6 = arith.constant 0.000000e+00 : f32
    %9 = vector.broadcast %cst_6 : f32 to vector<8x128xf32>
    %10 = arith.maximumf %8, %9 : vector<8x128xf32>
    %c0_7 = arith.constant 0 : index
    %c0_8 = arith.constant 0 : index
    %11 = vector.load %arg4[%c0_7, %c0_8] : memref<8x128xf32, #tpu.memory_space<vmem>>, vector<8x128xf32>
    tpu.vector_store %arg4[%c0_7, %c0_8], %10 {strides = array<i32>} : memref<8x128xf32, #tpu.memory_space<vmem>>, vector<8x128xf32>,
    %c0_9 = arith.constant 0 : index
    %c0_10 = arith.constant 0 : index
    %12 = vector.load %arg5[%c0_9, %c0_10] : memref<8x1xf32, #tpu.memory_space<vmem>>, vector<8x1xf32>
    %cst_11 = arith.constant dense<0.000000e+00> : vector<8xf32>
    %13 = vector.multi_reduction <add>, %10, %cst_11 [1] : vector<8x128xf32> to vector<8xf32>
    %14 = vector.shape_cast %13 : vector<8xf32> to vector<8x1xf32>
    %15 = arith.addf %12, %14 : vector<8x1xf32>
    %c0_12 = arith.constant 0 : index
    %c0_13 = arith.constant 0 : index
    %16 = vector.load %arg5[%c0_12, %c0_13] : memref<8x1xf32, #tpu.memory_space<vmem>>, vector<8x1xf32>
    tpu.vector_store %arg5[%c0_12, %c0_13], %15 {strides = array<i32>} : memref<8x1xf32, #tpu.memory_space<vmem>>, vector<8x1xf32>,
    %c0_14 = arith.constant 0 : index
    %c0_15 = arith.constant 0 : index
    %17 = vector.load %arg6[%c0_14, %c0_15] : memref<8x1xf32, #tpu.memory_space<vmem>>, vector<8x1xf32>
    %18 = arith.mulf %10, %10 : vector<8x128xf32>
    %cst_16 = arith.constant dense<0.000000e+00> : vector<8xf32>
    %19 = vector.multi_reduction <add>, %18, %cst_16 [1] : vector<8x128xf32> to vector<8xf32>
    %20 = vector.shape_cast %19 : vector<8xf32> to vector<8x1xf32>
    %21 = arith.addf %17, %20 : vector<8x1xf32>
    %c0_17 = arith.constant 0 : index
    %c0_18 = arith.constant 0 : index
    %22 = vector.load %arg6[%c0_17, %c0_18] : memref<8x1xf32, #tpu.memory_space<vmem>>, vector<8x1xf32>
    tpu.vector_store %arg6[%c0_17, %c0_18], %21 {strides = array<i32>} : memref<8x1xf32, #tpu.memory_space<vmem>>, vector<8x1xf32>,
    return
  }
  func.func @transform_0(%arg0: i32) -> (i32, i32) {
    %c0_i32 = arith.constant 0 : i32
    %c0_i32_0 = arith.constant 0 : i32
    return %c0_i32, %arg0 : i32, i32
  }
  func.func @transform_1(%arg0: i32) -> (i32, i32) {
    %c0_i32 = arith.constant 0 : i32
    %c0_i32_0 = arith.constant 0 : i32
    %c0_i32_1 = arith.constant 0 : i32
    return %c0_i32, %c0_i32_0 : i32, i32
  }
  func.func @transform_2(%arg0: i32) -> (i32, i32) {
    %c0_i32 = arith.constant 0 : i32
    %c0_i32_0 = arith.constant 0 : i32
    %c0_i32_1 = arith.constant 0 : i32
    return %c0_i32, %c0_i32_0 : i32, i32
  }
  func.func @transform_3(%arg0: i32) -> (i32, i32) {
    %c0_i32 = arith.constant 0 : i32
    %c0_i32_0 = arith.constant 0 : i32
    return %c0_i32, %arg0 : i32, i32
  }
  func.func @transform_4(%arg0: i32) -> (i32, i32) {
    %c0_i32 = arith.constant 0 : i32
    %c0_i32_0 = arith.constant 0 : i32
    %c0_i32_1 = arith.constant 0 : i32
    return %c0_i32, %c0_i32_0 : i32, i32
  }
  func.func @transform_5(%arg0: i32) -> (i32, i32) {
    %c0_i32 = arith.constant 0 : i32
    %c0_i32_0 = arith.constant 0 : i32
    %c0_i32_1 = arith.constant 0 : i32
    return %c0_i32, %c0_i32_0 : i32, i32
  }
}

</mosaic_0001>

<llo_original>
// kernel: tpu_custom_call.1
$region0: #{tpu_custom_call.1}
  #allocation0 [shape = 'u32[]', space=smem, size = 0x4, offset = 0x4, fixed_abs, tag = 'smem constant byte address 0x4 - core index']
  #allocation1 [shape = 'u32[72,128]{1,0:T(1,128)}', space=vmem, size = 0x9000, scoped, tag = 'internal scratch']
  %s0 = inlined_call_operand.hbm [shape: bf16[36,128], index: 0, kind: input, shape index: {}]
  %s1 = inlined_call_operand.vmem [shape: bf16[8,36], index: 1, kind: input, shape index: {}]
  %s2 = inlined_call_operand.vmem [shape: f32[8,1], index: 2, kind: input, shape index: {}]
  %s3 = inlined_call_operand.hbm [shape: f32[8,128], index: 3, kind: output, shape index: {0}]
  %s4 = inlined_call_operand.vmem [shape: f32[8,1], index: 4, kind: output, shape index: {1}]
  %s5 = inlined_call_operand.vmem [shape: f32[8,1], index: 5, kind: output, shape index: {2}]
  %6 = xla_tuple %s3, %s4, %s5
  %s7 = sld [smem:[#allocation0]]
  $region46: #{tpu_custom_call.1} parent=0
    _
  %s9 = ssub.s32 1, %s7
  %s10 = scalar_select 0, %s9, %s7
  $region1: #{tpu_custom_call.1} parent=0
    #allocation2 [shape = 'u8[10240]{0}', space=vmem, size = 0x2800, scoped, tag = 'input window, operand 0, single buffered']
    #allocation3 [shape = 's32[1]{0}', space=sflag, size = 0x4, scoped, tag = 'scoped memory for tpu_custom_call.1']
    #allocation4 [shape = 's32[1]{0}', space=sflag, size = 0x4, scoped, tag = 'scoped memory for tpu_custom_call.1']
    #allocation5 [shape = 'u8[4096]{0}', space=vmem, size = 0x1000, scoped, tag = 'output window, operand 0, single buffered']
    %11 = vsyncpa [#allocation3], 0
    %12 = vsyncpa [#allocation4], 0
    // Predicated region
    $region2: #{tpu_custom_call.1} parent=1 // pred_check
      _
    $region3: #{tpu_custom_call.1} parent=1 // pred_check_branch
      %14 = sbr.rel (0) target = $region5
    $region4: #{tpu_custom_call.1} parent=1 // pred_region
      %16 = vsyncadd [#allocation3], 0
      %s17 = sshll.u32 %s0, 4
      %s18 = int_to_ptr.hbm [resolvable:$true] %s17
      %s19 = sshll.u32 [#allocation2], 4
      %s20 = int_to_ptr.vmem [resolvable:$true] %s19
      %25 = dma.hbm_to_vmem [thread:$0]  %s18, 320, %s20, [#allocation3], 64, 64, 4
    $region5: #{tpu_custom_call.1} parent=1 // pred_fallthru
      _
    // Predicated region
    $region6: #{tpu_custom_call.1} parent=1 // pred_check
      _
    $region7: #{tpu_custom_call.1} parent=1 // pred_check_branch
      %27 = sbr.rel (0) target = $region9
    $region8: #{tpu_custom_call.1} parent=1 // pred_region
      _
    $region9: #{tpu_custom_call.1} parent=1 // pred_fallthru
      _
    // Predicated region
    $region10: #{tpu_custom_call.1} parent=1 // pred_check
      _
    $region11: #{tpu_custom_call.1} parent=1 // pred_check_branch
      %29 = sbr.rel (0) target = $region13
    $region12: #{tpu_custom_call.1} parent=1 // pred_region
      _
    $region13: #{tpu_custom_call.1} parent=1 // pred_fallthru
      _
    // Predicated region
    $region14: #{tpu_custom_call.1} parent=1 // pred_check
      _
    $region15: #{tpu_custom_call.1} parent=1 // pred_check_branch
      %31 = sbr.rel (0) target = $region17
    $region16: #{tpu_custom_call.1} parent=1 // pred_region
      %33 = dma.done [#allocation3], 320
    $region17: #{tpu_custom_call.1} parent=1 // pred_fallthru
      _
    %p35 = scmp.eq.s32.totalorder 0, 0
    // Predicated region
    $region18: #{tpu_custom_call.1} parent=1 // pred_check
      %p36 = pneg %p35
    $region19: #{tpu_custom_call.1} parent=1 // pred_check_branch
      %38 = sbr.rel (%p36) target = $region21
    $region20: #{tpu_custom_call.1} parent=1 // pred_region
      %vm39 = vcmask 7168
      %40 = vst.msk [vmem:[%s4] sm:$0xff] %vm39, 0.0
      %41 = vst.msk [vmem:[%s5] sm:$0xff] %vm39, 0.0
    $region21: #{tpu_custom_call.1} parent=1 // pred_fallthru
      _
    %v42 = vld [vmem:[%s1] sm:$0xf]
    %v43 = vld [vmem:[#allocation2] sm:$0xf]
    %v44 = vld [vmem:[#allocation2 + $0x4] sm:$0xf]
    %v45 = vld [vmem:[#allocation2 + $0x8] sm:$0xf]
    %v46 = vld [vmem:[#allocation2 + $0xc] sm:$0xf]
    %v47 = vld [vmem:[#allocation2 + $0x10] sm:$0x3]
    %v48 = vld [vmem:[%s2] sm:$0xff]
    %50 = vset.pattern.permute.xlu0 0
    %51 = vperm.xlu0 %50, %v48
    %v52 = vpop.permute.xlu0 %51
    %v59 = vunpack.c.l.b16 %v43
    %v60 = vunpack.c.l.b16 %v44
    %v61 = vunpack.c.l.b16 %v45
    %v62 = vunpack.c.l.b16 %v46
    %v63 = vunpack.c.l.b16 %v47
    %v64 = vpack.c.b16 %v60, %v59
    %v65 = vpack.c.b16 %v62, %v61
    %v66 = vpack.c.b16 %v63, %v63
    %vm69 = vcmask 293888
    %v71 = vsel %vm69, %v42, 0
    %vm73 = vcmask 1041408
    %v75 = vsel %vm73, %v66, 0
    %77 = vmatpush.bf16.msra.mxu0 0
    %78 = vmatpush.bf16.msra.mxu0 0
    %79 = vmatpush.bf16.msra.mxu0 0
    %80 = vmatpush.bf16.msra.mxu0 0
    %81 = vmatpush.bf16.msra.mxu0 0
    %82 = vmatpush.bf16.msra.mxu0 %v75
    %83 = vmatpush.bf16.msra.mxu0 %v65
    %84 = vmatpush.bf16.msra.mxu0 %v64
    %85 = vmatmul.bf16.gmra.mxu0 %v71
    %v86 = vpop.f32.mrf.mxu0
    %v87 = vadd.f32 %v52, %v86
    %v88 = vpop.f32.mrf.mxu0
    %89 = vdwg.mxu0
    %v90 = vmax.f32 %v87, 0.0
    %91 = vst [vmem:[#allocation5] sm:$0xff] %v90
    %v92 = vld [vmem:[%s4] sm:$0xff]
    %93 = vadd.xlane.f32.xlu0 %v90
    %v94 = vpop.xlane.xlu0 %93
    %v95 = vadd.f32 %v92, %v94
    %vm96 = vcmask 7168
    %97 = vst.msk [vmem:[%s4] sm:$0xff] %vm96, %v95
    %v98 = vld [vmem:[%s5] sm:$0xff]
    %v99 = vmul.f32 %v90, %v90
    %100 = vadd.xlane.f32.xlu0 %v99
    %v101 = vpop.xlane.xlu0 %100
    %v102 = vadd.f32 %v98, %v101
    %103 = vst.msk [vmem:[%s5] sm:$0xff] %vm96, %v102
    // Predicated region
    $region22: #{tpu_custom_call.1} parent=1 // pred_check
      _
    $region23: #{tpu_custom_call.1} parent=1 // pred_check_branch
      %105 = sbr.rel (0) target = $region25
    $region24: #{tpu_custom_call.1} parent=1 // pred_region
      %107 = vsyncadd [#allocation4], 0
      %s109 = sshll.u32 [#allocation5], 4
      %s110 = int_to_ptr.vmem [resolvable:$true] %s109
      %s111 = sshll.u32 %s3, 4
      %s112 = int_to_ptr.hbm [resolvable:$true] %s111
      %114 = dma.vmem_to_hbm [thread:$0]  %s110, 128, %s112, [#allocation4]
    $region25: #{tpu_custom_call.1} parent=1 // pred_fallthru
      _
    // Predicated region
    $region26: #{tpu_custom_call.1} parent=1 // pred_check
      _
    $region27: #{tpu_custom_call.1} parent=1 // pred_check_branch
      %116 = sbr.rel (0) target = $region29
    $region28: #{tpu_custom_call.1} parent=1 // pred_region
      _
    $region29: #{tpu_custom_call.1} parent=1 // pred_fallthru
      _
    // Predicated region
    $region30: #{tpu_custom_call.1} parent=1 // pred_check
      _
    $region31: #{tpu_custom_call.1} parent=1 // pred_check_branch
      %118 = sbr.rel (0) target = $region33
    $region32: #{tpu_custom_call.1} parent=1 // pred_region
      _
    $region33: #{tpu_custom_call.1} parent=1 // pred_fallthru
      _
    // Predicated region
    $region34: #{tpu_custom_call.1} parent=1 // pred_check
      _
    $region35: #{tpu_custom_call.1} parent=1 // pred_check_branch
      %120 = sbr.rel (0) target = $region37
    $region36: #{tpu_custom_call.1} parent=1 // pred_region
      %122 = dma.done [#allocation4], 128
    $region37: #{tpu_custom_call.1} parent=1 // pred_fallthru
      _
    // Predicated region
    $region38: #{tpu_custom_call.1} parent=1 // pred_check
      _
    $region39: #{tpu_custom_call.1} parent=1 // pred_check_branch
      %124 = sbr.rel (0) target = $region41
    $region40: #{tpu_custom_call.1} parent=1 // pred_region
      _
    $region41: #{tpu_custom_call.1} parent=1 // pred_fallthru
      _
    // Predicated region
    $region42: #{tpu_custom_call.1} parent=1 // pred_check
      _
    $region43: #{tpu_custom_call.1} parent=1 // pred_check_branch
      %126 = sbr.rel (0) target = $region45
    $region44: #{tpu_custom_call.1} parent=1 // pred_region
      _
    $region45: #{tpu_custom_call.1} parent=1 // pred_fallthru
      _
    %127 = vsyncpa [#allocation3], 1
    %128 = vsyncpa [#allocation4], 1

</llo_original>
